<compile_context>
chip_gen: v6e
topology: v6e:2x2x1
jax: 0.10.0
libtpu: 0.0.40
codegen_flags: <defaults>
</compile_context>

<pallas_src>
import jax
import jax.numpy as jnp
import numpy as np
from jax import lax
from jax.experimental import pallas as pl
from jax.experimental.pallas import tpu as pltpu


_LANE = 128
_VMEM_BUDGET = 24 * 1024 * 1024   # keep well under the 32 MiB default scoped VMEM limit
_SINGLE_BUFFER_OK = True          # flipped off if pl.Buffered(1) is rejected by this build


# ----------------------------- Pallas kernels --------------------------------

def _lateral_kernel(x_ref, w_ref, b_ref, o_ref, acc_ref):
    # x: (ck, t) bf16, w: (Cout, ck) bf16, b: (Cout, 1) f32 -> o: (Cout, t)
    # Grid = (N, hw_tiles, k_tiles); k (Cin tiling) is innermost / "arbitrary".
    @pl.when(pl.program_id(2) == 0)
    def _():
        acc_ref[...] = jnp.zeros_like(acc_ref)

    acc_ref[...] += jnp.dot(w_ref[...], x_ref[...],
                            preferred_element_type=jnp.float32)

    @pl.when(pl.program_id(2) == pl.num_programs(2) - 1)
    def _():
        o_ref[...] = (acc_ref[...] + b_ref[...]).astype(o_ref.dtype)


def _extra_levels_kernel(x_ref, *refs):
    # x: (blk_b, H*W).  refs = (K_1..K_L, o_1..o_L), K_l: (hw_l, hw_{l+1}) bf16 0/1.
    # Each level: y <- (y @ K_l) / 9  == avg_pool2d(y, 3, stride=2, padding=1), divisor 9.
    n = len(refs) // 2
    k_refs, o_refs = refs[:n], refs[n:]
    y = x_ref[...]
    for k_ref, o_ref in zip(k_refs, o_refs):
        y = jnp.dot(y.astype(k_ref.dtype), k_ref[...],
                    preferred_element_type=jnp.float32) * (1.0 / 9.0)
        o_ref[...] = y.astype(o_ref.dtype)


# ------------------------------ Helpers ---------------------------------------

def _const_spec(block_shape, index_map, single_buffer):
    """BlockSpec for an operand whose block never changes: single-buffer it if allowed."""
    if single_buffer:
        return pl.BlockSpec(block_shape, index_map, pipeline_mode=pl.Buffered(1))
    return pl.BlockSpec(block_shape, index_map)


def _run_pallas(build, args):
    """build(single_buffer: bool) -> pallas callable.

    Tries the VMEM-saving pl.Buffered(1) specs first; falls back to default double
    buffering if this JAX build rejects pipeline_mode (any genuine error re-raises
    from the fallback path, so nothing is silently hidden)."""
    global _SINGLE_BUFFER_OK
    if _SINGLE_BUFFER_OK:
        try:
            return build(True)(*args)
        except Exception:            # noqa: BLE001 - pipeline_mode unsupported
            _SINGLE_BUFFER_OK = False
    return build(False)(*args)


def _pick_hw_tile(HW, per_lane_bytes, fixed_bytes):
    """Pick a 128-multiple HW tile (<=2048): pad HW up instead of shrinking the tile,
    minimise pad waste, and respect the VMEM budget."""
    hw_r = pl.cdiv(HW, _LANE) * _LANE
    cands = [t for t in range(2048, _LANE - 1, -_LANE) if t <= max(hw_r, _LANE)]
    fit = [t for t in cands if fixed_bytes + t * per_lane_bytes <= _VMEM_BUDGET]
    if not fit:
        fit = [_LANE]
    # minimise total padded lanes (wasted DMA); ties -> larger tile (fewer grid steps)
    return min(fit, key=lambda t: (pl.cdiv(HW, t) * t, -t))


# ------------------------------ Wrappers --------------------------------------

def lateral_conv_1x1(x, w, b, *, mxu_dtype=jnp.bfloat16):
    """1x1 conv + bias, NCHW-native.  x: (N, Cin, H, W); w: (Cout, Cin); b: (Cout,).

    out[n] = W(Cout,Cin) @ x[n](Cin, H*W) + b, output last dim = H*W (lane-dense)."""
    N, Cin, H, W = x.shape
    Cout = w.shape[0]
    HW = H * W

    if HW < _LANE:
        # Tiny pyramid level: per-call launch + ~0.35us/step overhead plus masked
        # (<128-lane) vst.msk stores dwarf the compute -> plain XLA einsum is cheaper.
        out = jnp.einsum("nchw,oc->nohw", x, w) + b[None, :, None, None]
        return out.astype(x.dtype)

    x_bytes = jnp.dtype(mxu_dtype).itemsize
    o_bytes = jnp.dtype(x.dtype).itemsize

    # Cin tiling (K grid axis) so the streamed (ck, t) x-block + resident weight stay
    # within the VMEM budget even for very large Cin (v7x: 64 MiB physical VMEM).
    CK_MAX = 1024
    if Cin <= CK_MAX:
        ck, cin_pad = Cin, Cin
    else:
        ck = 512
        cin_pad = pl.cdiv(Cin, ck) * ck
    n_k = cin_pad // ck

    # VMEM accounting (worst case, double-buffered weight): weight + bias are "fixed",
    # x / out double-buffers + fp32 accumulator scale with the HW tile t.
    fixed = Cout * ck * x_bytes * 2 + Cout * 4 * 2
    per_lane = ck * x_bytes * 2 + Cout * o_bytes * 2 + Cout * 4
    t = _pick_hw_tile(HW, per_lane, fixed)
    hw_pad = pl.cdiv(HW, t) * t

    x3 = x.reshape(N, Cin, HW)
    if cin_pad != Cin or hw_pad != HW:
        x3 = jnp.pad(x3, ((0, 0), (0, cin_pad - Cin), (0, hw_pad - HW)))
    x3 = x3.astype(mxu_dtype)                         # bf16 MXU inputs, fp32 accumulation
    w_p = w.astype(mxu_dtype)
    if cin_pad != Cin:
        w_p = jnp.pad(w_p, ((0, 0), (0, cin_pad - Cin)))
    b2 = b.astype(jnp.float32).reshape(Cout, 1)

    grid = (N, hw_pad // t, n_k)

    def build(single_buffer):
        if n_k == 1:
            # Constant block index across the whole grid -> single buffer is enough.
            w_spec = _const_spec((Cout, ck), lambda n, i, k: (0, k), single_buffer)
        else:
            w_spec = pl.BlockSpec((Cout, ck), lambda n, i, k: (0, k))
        b_spec = _const_spec((Cout, 1), lambda n, i, k: (0, 0), single_buffer)
        return pl.pallas_call(
            _lateral_kernel,
            out_shape=jax.ShapeDtypeStruct((N, Cout, hw_pad), x.dtype),
            grid_spec=pltpu.PrefetchScalarGridSpec(
                num_scalar_prefetch=0,
                grid=grid,
                in_specs=[
                    pl.BlockSpec((None, ck, t), lambda n, i, k: (n, k, i)),
                    w_spec,
                    b_spec,
                ],
                out_specs=pl.BlockSpec((None, Cout, t), lambda n, i, k: (n, 0, i)),
                scratch_shapes=[pltpu.VMEM((Cout, t), jnp.float32)],
            ),
            compiler_params=pltpu.CompilerParams(
                dimension_semantics=("parallel", "parallel", "arbitrary")),
        )

    out = _run_pallas(build, (x3, w_p, b2))
    if hw_pad != HW:
        out = out[:, :, :HW]
    return out.reshape(N, Cout, H, W)


def _pool_selection_matrices(H, W):
    """0/1 selection matrices for avg_pool2d(3, stride=2, padding=1), count_include_pad=True."""
    Ho = (H - 1) // 2 + 1
    Wo = (W - 1) // 2 + 1
    qh = np.zeros((Ho, H), np.float32)
    for i in range(Ho):
        lo, hi = max(0, 2 * i - 1), min(H, 2 * i + 2)
        qh[i, lo:hi] = 1.0
    pw = np.zeros((W, Wo), np.float32)
    for j in range(Wo):
        lo, hi = max(0, 2 * j - 1), min(W, 2 * j + 2)
        pw[lo:hi, j] = 1.0
    return Ho, Wo, qh, pw


def extra_avg_pool_levels(x, num_levels):
    """num_levels repeated F.avg_pool2d(x, 3, stride=2, padding=1), fused in one pallas_call.

    The flattened B = N*C axis is tiled into 128-row blocks so the call pipelines,
    shards across TensorCores, and keeps vreg pressure bounded."""
    N, C, H, W = x.shape
    B = N * C
    HW = H * W

    dims, ks = [], []
    h, w = H, W
    for _ in range(num_levels):
        ho, wo, qh, pw = _pool_selection_matrices(h, w)
        # 0/1 selection matrix is exact in bf16 -> halves K's DMA / VMEM footprint.
        ks.append(jnp.asarray(np.kron(qh.T, pw), dtype=jnp.bfloat16))  # (h*w, ho*wo)
        dims.append((ho, wo))
        h, w = ho, wo
    # TODO(synk): for deepest levels >= ~64x64 switch to separable (W-then-H) pooling
    # matmuls to avoid the dense O(HW * HoWo) K matrix.

    ROWS = 128
    if B > ROWS:
        blk_b = ROWS
        b_pad = pl.cdiv(B, ROWS) * ROWS
    else:
        blk_b = pl.cdiv(B, 8) * 8
        b_pad = blk_b

    xb = x.reshape(B, HW)
    if b_pad != B:
        xb = jnp.pad(xb, ((0, b_pad - B), (0, 0)))

    grid = (b_pad // blk_b,)
    out_shape = tuple(jax.ShapeDtypeStruct((b_pad, ho * wo), x.dtype) for ho, wo in dims)

    def build(single_buffer):
        in_specs = [pl.BlockSpec((blk_b, HW), lambda i: (i, 0))]
        in_specs += [_const_spec(k.shape, lambda i: (0, 0), single_buffer) for k in ks]
        out_specs = [pl.BlockSpec((blk_b, ho * wo), lambda i: (i, 0)) for ho, wo in dims]
        return pl.pallas_call(
            _extra_levels_kernel,
            out_shape=out_shape,
            grid_spec=pltpu.PrefetchScalarGridSpec(
                num_scalar_prefetch=0,
                grid=grid,
                in_specs=in_specs,
                out_specs=out_specs,
            ),
            compiler_params=pltpu.CompilerParams(dimension_semantics=("parallel",)),
        )

    outs = _run_pallas(build, (xb, *ks))
    res = []
    for o, (ho, wo) in zip(outs, dims):
        if b_pad != B:
            o = o[:B]
        res.append(o.reshape(N, C, ho, wo))
    return res


# ------------------------------ SFPN module -----------------------------------

def init_sfpn_params(key, in_channels, out_channels):
    """Xavier-uniform-like init; weight stored as (Cout, Cin).  Random bias to exercise bias path."""
    params = []
    for cin in in_channels:
        key, kw, kb = jax.random.split(key, 3)
        bound = float(np.sqrt(6.0 / (cin + out_channels)))
        w = jax.random.uniform(kw, (out_channels, cin), jnp.float32, -bound, bound)
        b = jax.random.uniform(kb, (out_channels,), jnp.float32, -0.1, 0.1)
        params.append((w, b))
    return params


def sfpn_forward(inputs_nchw, params, num_outs):
    outs = [lateral_conv_1x1(x, w, b) for x, (w, b) in zip(inputs_nchw, params)]
    n_extra = num_outs - len(outs)
    if n_extra > 0:
        outs.extend(extra_avg_pool_levels(outs[-1], n_extra))
    # TODO(synk): grad_scale / scale_tensor_gard only affects gradients in training mode; no-op for forward.
    return tuple(outs)


def sfpn_reference(inputs_nchw, params, num_outs):
    """Pure-JAX fp32 reference for validation (NCHW throughout)."""
    outs = []
    for x, (w, b) in zip(inputs_nchw, params):
        outs.append(jnp.einsum("nchw,oc->nohw", x, w) + b[None, :, None, None])
    for _ in range(num_outs - len(outs)):
        x = outs[-1]
        s = lax.reduce_window(x, 0.0, lax.add, (1, 1, 3, 3), (1, 1, 2, 2),
                              [(0, 0), (0, 0), (1, 1), (1, 1)])
        outs.append(s / 9.0)
    return tuple(outs)


# ------------------------------ Main ------------------------------------------

if __name__ == "__main__":
    in_channels = [4, 8, 16]
    out_channels = 8
    num_outs = 5
    N = 2
    spatials = [16, 8, 4]

    root = jax.random.PRNGKey(0)
    kx, kp = jax.random.split(root)
    xkeys = jax.random.split(kx, len(in_channels))
    inputs = [
        jax.random.normal(k, (N, c, s, s), jnp.float32)
        for k, c, s in zip(xkeys, in_channels, spatials)
    ]
    params = init_sfpn_params(kp, in_channels, out_channels)

    outs = jax.block_until_ready(sfpn_forward(inputs, params, num_outs))

    refs = sfpn_reference(inputs, params, num_outs)
    # bf16 MXU inputs (fp32 accumulation) -> tolerance loosened from 1e-4 to 2e-2.
    for o, r in zip(outs, refs):
        assert o.shape == r.shape, (o.shape, r.shape)
        np.testing.assert_allclose(np.asarray(o), np.asarray(r), rtol=2e-2, atol=2e-2)

    print("KERNEL_OK")
</pallas_src>

<mosaic_0001>
module attributes {stable_mosaic.version = 11 : i64} {
  func.func @_lateral_kernel(%arg0: i32, %arg1: i32, %arg2: i32, %arg3: memref<1x4x256xbf16, #tpu.memory_space<vmem>>, %arg4: memref<8x4xbf16, #tpu.memory_space<vmem>>, %arg5: memref<8x1xf32, #tpu.memory_space<vmem>>, %arg6: memref<1x8x256xf32, #tpu.memory_space<vmem>>, %arg7: memref<8x256xf32, #tpu.memory_space<vmem>>) attributes {dimension_semantics = [#tpu.dimension_semantics<parallel>, #tpu.dimension_semantics<parallel>, #tpu.dimension_semantics<arbitrary>], iteration_bounds = array<i64: 2, 1, 1>, scalar_prefetch = 0 : i64, scratch_operands = 1 : i64, tpu.core_type = #tpu.core_type<tc>, window_params = [{transform_indices = @transform_0, window_bounds = array<i64: 1, 4, 256>}, {pipeline_mode = #tpu.pipeline_mode<synchronous>, transform_indices = @transform_1, window_bounds = array<i64: 8, 4>}, {pipeline_mode = #tpu.pipeline_mode<synchronous>, transform_indices = @transform_2, window_bounds = array<i64: 8, 1>}, {transform_indices = @transform_3, window_bounds = array<i64: 1, 8, 256>}]} {
    %c0_i32 = arith.constant 0 : i32
    %0 = arith.cmpi eq, %arg2, %c0_i32 : i32
    %1 = arith.extui %0 : i1 to i32
    %c0_i32_0 = arith.constant 0 : i32
    %2 = arith.cmpi ne, %1, %c0_i32_0 : i32
    scf.if %2 {
      %cst_11 = arith.constant 0.000000e+00 : f32
      %13 = vector.broadcast %cst_11 : f32 to vector<8x256xf32>
      %c0_12 = arith.constant 0 : index
      %c0_13 = arith.constant 0 : index
      %14 = vector.load %arg7[%c0_12, %c0_13] : memref<8x256xf32, #tpu.memory_space<vmem>>, vector<8x256xf32>
      tpu.vector_store %arg7[%c0_12, %c0_13], %13 {strides = array<i32>} : memref<8x256xf32, #tpu.memory_space<vmem>>, vector<8x256xf32>,
    } else {
    }
    %c0 = arith.constant 0 : index
    %c0_1 = arith.constant 0 : index
    %3 = vector.load %arg7[%c0, %c0_1] : memref<8x256xf32, #tpu.memory_space<vmem>>, vector<8x256xf32>
    %c0_2 = arith.constant 0 : index
    %c0_3 = arith.constant 0 : index
    %4 = vector.load %arg4[%c0_2, %c0_3] : memref<8x4xbf16, #tpu.memory_space<vmem>>, vector<8x4xbf16>
    %c0_4 = arith.constant 0 : index
    %c0_5 = arith.constant 0 : index
    %c0_6 = arith.constant 0 : index
    %5 = vector.load %arg3[%c0_4, %c0_5, %c0_6] : memref<1x4x256xbf16, #tpu.memory_space<vmem>>, vector<1x4x256xbf16>
    %6 = vector.shape_cast %5 : vector<1x4x256xbf16> to vector<4x256xbf16>
    %cst = arith.constant dense<0.000000e+00> : vector<8x256xf32>
    %7 = tpu.matmul %4, %6, %cst {dimension_numbers = #tpu.dot_dimension_numbers<[1], [0], [0], [1], [0, 0, 1, 1], [], []>} : vector<8x4xbf16>, vector<4x256xbf16>, vector<8x256xf32> -> vector<8x256xf32>
    %8 = arith.addf %3, %7 : vector<8x256xf32>
    %c0_7 = arith.constant 0 : index
    %c0_8 = arith.constant 0 : index
    %9 = vector.load %arg7[%c0_7, %c0_8] : memref<8x256xf32, #tpu.memory_space<vmem>>, vector<8x256xf32>
    tpu.vector_store %arg7[%c0_7, %c0_8], %8 {strides = array<i32>} : memref<8x256xf32, #tpu.memory_space<vmem>>, vector<8x256xf32>,
    %c0_i32_9 = arith.constant 0 : i32
    %10 = arith.cmpi eq, %arg2, %c0_i32_9 : i32
    %11 = arith.extui %10 : i1 to i32
    %c0_i32_10 = arith.constant 0 : i32
    %12 = arith.cmpi ne, %11, %c0_i32_10 : i32
    scf.if %12 {
      %c0_11 = arith.constant 0 : index
      %c0_12 = arith.constant 0 : index
      %13 = vector.load %arg7[%c0_11, %c0_12] : memref<8x256xf32, #tpu.memory_space<vmem>>, vector<8x256xf32>
      %c0_13 = arith.constant 0 : index
      %c0_14 = arith.constant 0 : index
      %14 = vector.load %arg5[%c0_13, %c0_14] : memref<8x1xf32, #tpu.memory_space<vmem>>, vector<8x1xf32>
      %15 = vector.broadcast %14 : vector<8x1xf32> to vector<8x256xf32>
      %16 = arith.addf %13, %15 : vector<8x256xf32>
      %c0_15 = arith.constant 0 : index
      %c0_16 = arith.constant 0 : index
      %c0_17 = arith.constant 0 : index
      %17 = vector.load %arg6[%c0_15, %c0_16, %c0_17] : memref<1x8x256xf32, #tpu.memory_space<vmem>>, vector<1x8x256xf32>
      %18 = vector.shape_cast %17 : vector<1x8x256xf32> to vector<8x256xf32>
      %19 = vector.shape_cast %16 : vector<8x256xf32> to vector<1x8x256xf32>
      tpu.vector_store %arg6[%c0_15, %c0_16, %c0_17], %19 {strides = array<i32>} : memref<1x8x256xf32, #tpu.memory_space<vmem>>, vector<1x8x256xf32>,
    } else {
    }
    return
  }
  func.func @transform_0(%arg0: i32, %arg1: i32, %arg2: i32) -> (i32, i32, i32) {
    %c0_i32 = arith.constant 0 : i32
    return %arg0, %arg2, %arg1 : i32, i32, i32
  }
  func.func @transform_1(%arg0: i32, %arg1: i32, %arg2: i32) -> (i32, i32) {
    %c0_i32 = arith.constant 0 : i32
    %c0_i32_0 = arith.constant 0 : i32
    return %c0_i32, %arg2 : i32, i32
  }
  func.func @transform_2(%arg0: i32, %arg1: i32, %arg2: i32) -> (i32, i32) {
    %c0_i32 = arith.constant 0 : i32
    %c0_i32_0 = arith.constant 0 : i32
    %c0_i32_1 = arith.constant 0 : i32
    return %c0_i32, %c0_i32_0 : i32, i32
  }
  func.func @transform_3(%arg0: i32, %arg1: i32, %arg2: i32) -> (i32, i32, i32) {
    %c0_i32 = arith.constant 0 : i32
    %c0_i32_0 = arith.constant 0 : i32
    return %arg0, %c0_i32, %arg1 : i32, i32, i32
  }
}

module attributes {stable_mosaic.version = 11 : i64} {
  func.func @_lateral_kernel(%arg0: i32, %arg1: i32, %arg2: i32, %arg3: memref<1x4x256xbf16, #tpu.memory_space<vmem>>, %arg4: memref<8x4xbf16, #tpu.memory_space<vmem>>, %arg5: memref<8x1xf32, #tpu.memory_space<vmem>>, %arg6: memref<1x8x256xf32, #tpu.memory_space<vmem>>, %arg7: memref<8x256xf32, #tpu.memory_space<vmem>>) attributes {dimension_semantics = [#tpu.dimension_semantics<parallel>, #tpu.dimension_semantics<parallel>, #tpu.dimension_semantics<arbitrary>], iteration_bounds = array<i64: 2, 1, 1>, scalar_prefetch = 0 : i64, scratch_operands = 1 : i64, tpu.core_type = #tpu.core_type<tc>, window_params = [{transform_indices = @transform_0, window_bounds = array<i64: 1, 4, 256>}, {transform_indices = @transform_1, window_bounds = array<i64: 8, 4>}, {pipeline_mode = #tpu.pipeline_mode<synchronous>, transform_indices = @transform_2, window_bounds = array<i64: 8, 1>}, {transform_indices = @transform_3, window_bounds = array<i64: 1, 8, 256>}]} {
    %c0_i32 = arith.constant 0 : i32
    %0 = arith.cmpi eq, %arg2, %c0_i32 : i32
    %1 = arith.extui %0 : i1 to i32
    %c0_i32_0 = arith.constant 0 : i32
    %2 = arith.cmpi ne, %1, %c0_i32_0 : i32
    scf.if %2 {
      %cst_11 = arith.constant 0.000000e+00 : f32
      %13 = vector.broadcast %cst_11 : f32 to vector<8x256xf32>
      %c0_12 = arith.constant 0 : index
      %c0_13 = arith.constant 0 : index
      %14 = vector.load %arg7[%c0_12, %c0_13] : memref<8x256xf32, #tpu.memory_space<vmem>>, vector<8x256xf32>
      tpu.vector_store %arg7[%c0_12, %c0_13], %13 {strides = array<i32>} : memref<8x256xf32, #tpu.memory_space<vmem>>, vector<8x256xf32>,
    } else {
    }
    %c0 = arith.constant 0 : index
    %c0_1 = arith.constant 0 : index
    %3 = vector.load %arg7[%c0, %c0_1] : memref<8x256xf32, #tpu.memory_space<vmem>>, vector<8x256xf32>
    %c0_2 = arith.constant 0 : index
    %c0_3 = arith.constant 0 : index
    %4 = vector.load %arg4[%c0_2, %c0_3] : memref<8x4xbf16, #tpu.memory_space<vmem>>, vector<8x4xbf16>
    %c0_4 = arith.constant 0 : index
    %c0_5 = arith.constant 0 : index
    %c0_6 = arith.constant 0 : index
    %5 = vector.load %arg3[%c0_4, %c0_5, %c0_6] : memref<1x4x256xbf16, #tpu.memory_space<vmem>>, vector<1x4x256xbf16>
    %6 = vector.shape_cast %5 : vector<1x4x256xbf16> to vector<4x256xbf16>
    %cst = arith.constant dense<0.000000e+00> : vector<8x256xf32>
    %7 = tpu.matmul %4, %6, %cst {dimension_numbers = #tpu.dot_dimension_numbers<[1], [0], [0], [1], [0, 0, 1, 1], [], []>} : vector<8x4xbf16>, vector<4x256xbf16>, vector<8x256xf32> -> vector<8x256xf32>
    %8 = arith.addf %3, %7 : vector<8x256xf32>
    %c0_7 = arith.constant 0 : index
    %c0_8 = arith.constant 0 : index
    %9 = vector.load %arg7[%c0_7, %c0_8] : memref<8x256xf32, #tpu.memory_space<vmem>>, vector<8x256xf32>
    tpu.vector_store %arg7[%c0_7, %c0_8], %8 {strides = array<i32>} : memref<8x256xf32, #tpu.memory_space<vmem>>, vector<8x256xf32>,
    %c0_i32_9 = arith.constant 0 : i32
    %10 = arith.cmpi eq, %arg2, %c0_i32_9 : i32
    %11 = arith.extui %10 : i1 to i32
    %c0_i32_10 = arith.constant 0 : i32
    %12 = arith.cmpi ne, %11, %c0_i32_10 : i32
    scf.if %12 {
      %c0_11 = arith.constant 0 : index
      %c0_12 = arith.constant 0 : index
      %13 = vector.load %arg7[%c0_11, %c0_12] : memref<8x256xf32, #tpu.memory_space<vmem>>, vector<8x256xf32>
      %c0_13 = arith.constant 0 : index
      %c0_14 = arith.constant 0 : index
      %14 = vector.load %arg5[%c0_13, %c0_14] : memref<8x1xf32, #tpu.memory_space<vmem>>, vector<8x1xf32>
      %15 = vector.broadcast %14 : vector<8x1xf32> to vector<8x256xf32>
      %16 = arith.addf %13, %15 : vector<8x256xf32>
      %c0_15 = arith.constant 0 : index
      %c0_16 = arith.constant 0 : index
      %c0_17 = arith.constant 0 : index
      %17 = vector.load %arg6[%c0_15, %c0_16, %c0_17] : memref<1x8x256xf32, #tpu.memory_space<vmem>>, vector<1x8x256xf32>
      %18 = vector.shape_cast %17 : vector<1x8x256xf32> to vector<8x256xf32>
      %19 = vector.shape_cast %16 : vector<8x256xf32> to vector<1x8x256xf32>
      tpu.vector_store %arg6[%c0_15, %c0_16, %c0_17], %19 {strides = array<i32>} : memref<1x8x256xf32, #tpu.memory_space<vmem>>, vector<1x8x256xf32>,
    } else {
    }
    return
  }
  func.func @transform_0(%arg0: i32, %arg1: i32, %arg2: i32) -> (i32, i32, i32) {
    %c0_i32 = arith.constant 0 : i32
    return %arg0, %arg2, %arg1 : i32, i32, i32
  }
  func.func @transform_1(%arg0: i32, %arg1: i32, %arg2: i32) -> (i32, i32) {
    %c0_i32 = arith.constant 0 : i32
    %c0_i32_0 = arith.constant 0 : i32
    return %c0_i32, %arg2 : i32, i32
  }
  func.func @transform_2(%arg0: i32, %arg1: i32, %arg2: i32) -> (i32, i32) {
    %c0_i32 = arith.constant 0 : i32
    %c0_i32_0 = arith.constant 0 : i32
    %c0_i32_1 = arith.constant 0 : i32
    return %c0_i32, %c0_i32_0 : i32, i32
  }
  func.func @transform_3(%arg0: i32, %arg1: i32, %arg2: i32) -> (i32, i32, i32) {
    %c0_i32 = arith.constant 0 : i32
    %c0_i32_0 = arith.constant 0 : i32
    return %arg0, %c0_i32, %arg1 : i32, i32, i32
  }
}

</mosaic_0001>

<llo_original>
// kernel: tpu_custom_call.1
$region0: #{tpu_custom_call.1}
  #allocation0 [shape = 'u32[]', space=smem, size = 0x4, offset = 0x4, fixed_abs, tag = 'smem constant byte address 0x4 - core index']
  #allocation1 [shape = 'u32[144,128]{1,0:T(1,128)}', space=vmem, size = 0x12000, scoped, tag = 'internal scratch']
  #allocation2 [shape = 'f32[8,256]{1,0:T(8,128)}', space=vmem, size = 0x2000, scoped, tag = 'scratch operand']
  %s0 = inlined_call_operand.vmem [shape: bf16[2,4,256], index: 0, kind: input, shape index: {}]
  %s1 = inlined_call_operand.vmem [shape: bf16[8,4], index: 1, kind: input, shape index: {}]
  %s2 = inlined_call_operand.vmem [shape: f32[8,1], index: 2, kind: input, shape index: {}]
  %s3 = inlined_call_operand.hbm [shape: f32[2,8,256], index: 3, kind: output, shape index: {}]
  %s4 = sld [smem:[#allocation0]]
  $region53: #{tpu_custom_call.1} parent=0
    _
  %s6 = ssub.s32 1, %s4
  %s7 = scalar_select 0, %s6, %s4
  $region1: #{tpu_custom_call.1} parent=0
    #allocation3 [shape = 'u8[16384]{0}', space=vmem, size = 0x4000, scoped, tag = 'output window, operand 0']
    #allocation4 [shape = 's32[2]{0}', space=sflag, size = 0x8, scoped, tag = 'scoped memory for tpu_custom_call.1']
    %8 = vsyncpa [#allocation4], 0
    %s9 = scalar_lea.sflag [#allocation4], 1
    %10 = vsyncpa %s9, 0
    loop: start=0, step=1, limit=4
    $region2: #{tpu_custom_call.1} parent=1 // loop_pre_header
      _
    $region3: #{tpu_custom_call.1} parent=1 // loop_header
      %s12 = sphi 0, %s16
      %p13 = scmp.ge.s32.totalorder %s12, 4
      %s19 = sphi 0, %s38
      %s20 = sphi 0, %s34
      %s21 = sphi 0, %s30
      %s22 = sphi 0, %s19
      %s23 = sphi 0, %s20
      %s24 = sphi 0, %s21
      %s25 = sphi 0, %s22
      %s26 = sphi 0, %s23
      %s27 = sphi 0, %s24
      %s45 = sphi 0, %s47
      %s48 = sphi 0, %s45
      %s49 = sphi 0, %s48
      %s65 = sphi 0, %s49
      %s71 = sphi 0, %s73
      %s74 = sphi 0, %s71
      %s75 = sphi 0, %s74
      %s91 = sphi 0, %s75
      %s95 = sphi 0, %s95
      %s97 = sphi 0, %s95
      %s98 = sphi 0, %s97
      %s112 = sphi 0, %s98
      %s120 = sphi 0, %s122
      %s123 = sphi 0, %s120
      %s124 = sphi 0, %s123
      %s140 = sphi 0, %s124
    $region4: #{tpu_custom_call.1} parent=1 // loop_header_branch
      %15 = sbr.rel (%p13) target = $region8
    $region5: #{tpu_custom_call.1} parent=1 // loop_body
      %s17 = ssub.s32 %s12, 1
      %s18 = ssub.s32 %s12, 2
      %s28 = sadd.s32 1, %s21
      %p29 = scmp.ge.s32.totalorder %s28, 1
      %s30 = scalar_select %p29, 0, %s28
      %s31 = sadd.s32 1, %s20
      %s32 = scalar_select %p29, %s31, %s20
      %p33 = scmp.ge.s32.totalorder %s32, 1
      %s34 = scalar_select %p33, 0, %s32
      %s35 = sadd.s32 1, %s19
      %s36 = scalar_select %p33, %s35, %s19
      %p37 = scmp.ge.s32.totalorder %s36, 2
      %s38 = scalar_select %p37, 0, %s36
      %s39 = ssub.s32 %s19, %s38
      %s40 = ssub.s32 %s21, %s30
      %s41 = sor.u32 %s39, %s40
      %s42 = ssub.s32 %s20, %s34
      %s43 = sor.u32 %s41, %s42
      %p44 = scmp.eq.s32.totalorder %s43, 0
      %s46 = sadd.s32 %s45, 1
      %s47 = scalar_select %p44, %s45, %s46
      %p50 = pneg %p44
      %p51 = scmp.eq.s32.totalorder %s12, 1
      %p52 = por %p50, %p51
      %p53 = scmp.ne.s32.totalorder %s45, %s48
      %p54 = scmp.eq.s32.totalorder %s12, 0
      %p55 = por %p53, %p54
      %p56 = scmp.ne.s32.totalorder %s45, %s48
      %p57 = scmp.eq.s32.totalorder %s17, 1
      %p58 = por %p56, %p57
      %p59 = scmp.ne.s32.totalorder %s48, %s49
      %p60 = scmp.eq.s32.totalorder %s17, 0
      %p61 = por %p59, %p60
      %p62 = scmp.ne.s32.totalorder %s48, %s49
      %p63 = scmp.eq.s32.totalorder %s18, 1
      %p64 = por %p62, %p63
      %p66 = scmp.ne.s32.totalorder %s49, %s65
      %p67 = scmp.eq.s32.totalorder %s18, 0
      %p68 = por %p66, %p67
      %s69 = ssub.s32 %s21, %s30
      %p70 = scmp.eq.s32.totalorder %s69, 0
      %s72 = sadd.s32 %s71, 1
      %s73 = scalar_select %p70, %s71, %s72
      %p76 = pneg %p70
      %p77 = scmp.eq.s32.totalorder %s12, 1
      %p78 = por %p76, %p77
      %p79 = scmp.ne.s32.totalorder %s71, %s74
      %p80 = scmp.eq.s32.totalorder %s12, 0
      %p81 = por %p79, %p80
      %p82 = scmp.ne.s32.totalorder %s71, %s74
      %p83 = scmp.eq.s32.totalorder %s17, 1
      %p84 = por %p82, %p83
      %p85 = scmp.ne.s32.totalorder %s74, %s75
      %p86 = scmp.eq.s32.totalorder %s17, 0
      %p87 = por %p85, %p86
      %p88 = scmp.ne.s32.totalorder %s74, %s75
      %p89 = scmp.eq.s32.totalorder %s18, 1
      %p90 = por %p88, %p89
      %p92 = scmp.ne.s32.totalorder %s75, %s91
      %p93 = scmp.eq.s32.totalorder %s18, 0
      %p94 = por %p92, %p93
      %s96 = sadd.s32 %s95, 1
      %p99 = scmp.eq.s32.totalorder %s12, 1
      %p100 = scmp.ne.s32.totalorder %s95, %s97
      %p101 = scmp.eq.s32.totalorder %s12, 0
      %p102 = por %p100, %p101
      %p103 = scmp.ne.s32.totalorder %s95, %s97
      %p104 = scmp.eq.s32.totalorder %s17, 1
      %p105 = por %p103, %p104
      %p106 = scmp.ne.s32.totalorder %s97, %s98
      %p107 = scmp.eq.s32.totalorder %s17, 0
      %p108 = por %p106, %p107
      %p109 = scmp.ne.s32.totalorder %s97, %s98
      %p110 = scmp.eq.s32.totalorder %s18, 1
      %p111 = por %p109, %p110
      %p113 = scmp.ne.s32.totalorder %s98, %s112
      %p114 = scmp.eq.s32.totalorder %s18, 0
      %p115 = por %p113, %p114
      %s116 = ssub.s32 %s19, %s38
      %s117 = ssub.s32 %s20, %s34
      %s118 = sor.u32 %s116, %s117
      %p119 = scmp.eq.s32.totalorder %s118, 0
      %s121 = sadd.s32 %s120, 1
      %s122 = scalar_select %p119, %s120, %s121
      %p125 = pneg %p119
      %p126 = scmp.eq.s32.totalorder %s12, 1
      %p127 = por %p125, %p126
      %p128 = scmp.ne.s32.totalorder %s120, %s123
      %p129 = scmp.eq.s32.totalorder %s12, 0
      %p130 = por %p128, %p129
      %p131 = scmp.ne.s32.totalorder %s120, %s123
      %p132 = scmp.eq.s32.totalorder %s17, 1
      %p133 = por %p131, %p132
      %p134 = scmp.ne.s32.totalorder %s123, %s124
      %p135 = scmp.eq.s32.totalorder %s17, 0
      %p136 = por %p134, %p135
      %p137 = scmp.ne.s32.totalorder %s123, %s124
      %p138 = scmp.eq.s32.totalorder %s18, 1
      %p139 = por %p137, %p138
      %p141 = scmp.ne.s32.totalorder %s124, %s140
      %p142 = scmp.eq.s32.totalorder %s18, 0
      %p143 = por %p141, %p142
      %p144 = scmp.le.s32.totalorder 1, %s12
      %p145 = scmp.lt.s32.totalorder %s12, 3
      %p146 = pnand %p144, %p145
      %p147 = pneg %p146
      // Predicated region
      $region9: #{tpu_custom_call.1} parent=5 // pred_check
        _
      $region10: #{tpu_custom_call.1} parent=5 // pred_check_branch
        %149 = sbr.rel (%p146) target = $region12
      $region11: #{tpu_custom_call.1} parent=5 // pred_region
        %s150 = ssub.s32 %s12, 1
        // Predicated region
        $region13: #{tpu_custom_call.1} parent=11 // pred_check
          %p151 = pneg %p87
        $region14: #{tpu_custom_call.1} parent=11 // pred_check_branch
          %153 = sbr.rel (%p151) target = $region16
        $region15: #{tpu_custom_call.1} parent=11 // pred_region
          %p154 = scmp.lt.s32.totalorder %s24, 0
          %s155 = scalar_select %p154, %s24, 0
          %s156 = smul.addr %s155, 4
          %s157 = scalar_lea.vmem %s1, %s156
        $region16: #{tpu_custom_call.1} parent=11 // pred_fallthru
          _
        // Predicated region
        $region17: #{tpu_custom_call.1} parent=11 // pred_check
          %p158 = pneg %p108
        $region18: #{tpu_custom_call.1} parent=11 // pred_check_branch
          %160 = sbr.rel (%p158) target = $region20
        $region19: #{tpu_custom_call.1} parent=11 // pred_region
          _
        $region20: #{tpu_custom_call.1} parent=11 // pred_fallthru
          _
      $region12: #{tpu_custom_call.1} parent=5 // pred_fallthru
        _
      %p161 = scmp.lt.s32.totalorder %s12, 2
      // Predicated region
      $region21: #{tpu_custom_call.1} parent=5 // pred_check
        %p162 = pneg %p161
      $region22: #{tpu_custom_call.1} parent=5 // pred_check_branch
        %164 = sbr.rel (%p162) target = $region24
      $region23: #{tpu_custom_call.1} parent=5 // pred_region
        // Predicated region
        $region25: #{tpu_custom_call.1} parent=23 // pred_check
          %p165 = pneg %p55
        $region26: #{tpu_custom_call.1} parent=23 // pred_check_branch
          %167 = sbr.rel (%p165) target = $region28
        $region27: #{tpu_custom_call.1} parent=23 // pred_region
          %s168 = smul.u32 2, %s20
          %p169 = scmp.lt.s32.totalorder %s19, 1
          %s170 = scalar_select %p169, %s19, 1
          %p171 = scmp.lt.s32.totalorder %s21, 0
          %s172 = scalar_select %p171, %s21, 0
          %p173 = scmp.lt.s32.totalorder %s168, 1
          %s174 = scalar_select %p173, %s168, 1
          %s175 = smul.addr %s172, 2
          %s176 = sadd.s32 %s174, %s175
          %s177 = smul.addr %s170, 2
          %s178 = sadd.s32 %s176, %s177
          %s179 = smul.addr %s178, 2
          %s180 = scalar_lea.vmem %s0, %s179
          %s181 = smul.u32 2, %s20
        $region28: #{tpu_custom_call.1} parent=23 // pred_fallthru
          _
      $region24: #{tpu_custom_call.1} parent=5 // pred_fallthru
        _
      %p182 = scmp.le.s32.totalorder 1, %s12
      %p183 = scmp.lt.s32.totalorder %s12, 3
      %p184 = pnand %p182, %p183
      %p185 = pneg %p184
      // Predicated region
      $region29: #{tpu_custom_call.1} parent=5 // pred_check
        _
      $region30: #{tpu_custom_call.1} parent=5 // pred_check_branch
        %187 = sbr.rel (%p184) target = $region32
      $region31: #{tpu_custom_call.1} parent=5 // pred_region
        %s188 = ssub.s32 %s12, 1
        %s189 = smul.u32 2, %s23
        %p190 = scmp.lt.s32.totalorder %s22, 1
        %s191 = scalar_select %p190, %s22, 1
        %p192 = scmp.lt.s32.totalorder %s24, 0
        %s193 = scalar_select %p192, %s24, 0
        %p194 = scmp.lt.s32.totalorder %s189, 1
        %s195 = scalar_select %p194, %s189, 1
        %s196 = smul.addr %s193, 2
        %s197 = sadd.s32 %s195, %s196
        %s198 = smul.addr %s191, 2
        %s199 = sadd.s32 %s197, %s198
        %s200 = smul.addr %s199, 2
        %s201 = scalar_lea.vmem %s0, %s200
        %p202 = pneg %p61
        %p203 = pneg %p58
        %p204 = scmp.lt.s32.totalorder %s24, 0
        %s205 = scalar_select %p204, %s24, 0
        %s206 = smul.addr %s205, 4
        %s207 = scalar_lea.vmem %s1, %s206
        %p208 = pneg %p87
        %p209 = pneg %p84
        %p210 = pneg %p108
        %p211 = pneg %p105
        %p212 = pneg %p136
        %p213 = pneg %p133
        %s214 = sand.u32 %s123, 1
        %s215 = scalar_lea.sflag [#allocation4], %s214
        %s216 = sand.u32 %s123, 1
        %s217 = smul.addr %s216, 16
        %s218 = scalar_lea.vmem [#allocation3], %s217
        %s219 = smul.u32 2, %s23
        %p220 = scmp.lt.s32.totalorder %s22, 1
        %s221 = scalar_select %p220, %s22, 1
        %p222 = scmp.lt.s32.totalorder %s24, 0
        %s223 = scalar_select %p222, %s24, 0
        %p224 = scmp.lt.s32.totalorder %s219, 1
        %s225 = scalar_select %p224, %s219, 1
        %s226 = smul.addr %s223, 2
        %s227 = sadd.s32 %s225, %s226
        %s228 = smul.addr %s221, 2
        %s229 = sadd.s32 %s227, %s228
        %s230 = smul.addr %s229, 2
        %s231 = scalar_lea.vmem %s0, %s230
        %s232 = smul.u32 2, %s23
        %p233 = scmp.lt.s32.totalorder %s24, 0
        %s234 = scalar_select %p233, %s24, 0
        %s235 = smul.addr %s234, 4
        %s236 = scalar_lea.vmem %s1, %s235
        %s237 = smul.u32 2, %s23
        %p239 = scmp.eq.s32.totalorder %s24, 0
        // Predicated region
        $region33: #{tpu_custom_call.1} parent=31 // pred_check
          %p240 = pneg %p239
        $region34: #{tpu_custom_call.1} parent=31 // pred_check_branch
          %242 = sbr.rel (%p240) target = $region36
        $region35: #{tpu_custom_call.1} parent=31 // pred_region
          %243 = vst [vmem:[#allocation2] sm:$0xff] 0.0
          %244 = vst [vmem:[#allocation2 + $0x8] sm:$0xff] 0.0
        $region36: #{tpu_custom_call.1} parent=31 // pred_fallthru
          _
        %v245 = vld [vmem:[#allocation2] sm:$0xff]
        %v246 = vld [vmem:[#allocation2 + $0x8] sm:$0xff]
        %v247 = vld [vmem:[%s236] sm:$0xf]
        %v248 = vld [vmem:[%s231] sm:$0xf]
        %v251 = vunpack.c.l.s4 1983009808
        %v252 = vunpack.c.0.s8 %v251
        %v253 = vlaneseq
        %v254 = vshrl.u32 %v253, 7
        %v255 = vsub.s32 %v252, %v254
        %v256 = vrot.slane %v248, %v255
        %v257 = vcombine.high %v256, %v256
        %vm258 = vcmask 31744
        %v260 = vsel %vm258, %v247, 0
        %vm262 = vcmask 1041408
        %v264 = vsel %vm262, %v256, 0
        %v267 = vsel %vm262, %v257, 0
        %269 = vmatprep.subr.bf16.mxu0 0
        %270 = vmatpush1.bf16.msra.mxu0 0
        %271 = vmatprep.subr.bf16.mxu0 0
        %272 = vmatpush1.bf16.msra.mxu0 0
        %273 = vmatprep.subr.bf16.mxu0 0
        %274 = vmatpush1.bf16.msra.mxu0 0
        %275 = vmatprep.subr.bf16.mxu0 0
        %276 = vmatpush1.bf16.msra.mxu0 0
        %277 = vmatprep.subr.bf16.mxu0 0
        %278 = vmatpush1.bf16.msra.mxu0 0
        %279 = vmatprep.subr.bf16.mxu0 0
        %280 = vmatpush1.bf16.msra.mxu0 0
        %281 = vmatprep.subr.bf16.mxu0 0
        %282 = vmatpush1.bf16.msra.mxu0 0
        %283 = vmatprep.subr.bf16.mxu0 %v267
        %284 = vmatpush1.bf16.msra.mxu0 %v264
        %285 = vmatprep.subr.bf16.mxu0 0
        %286 = vmatpush2.bf16.msra.mxu0 0
        %287 = vmatprep.subr.bf16.mxu0 0
        %288 = vmatpush2.bf16.msra.mxu0 0
        %289 = vmatprep.subr.bf16.mxu0 0
        %290 = vmatpush2.bf16.msra.mxu0 0
        %291 = vmatprep.subr.bf16.mxu0 0
        %292 = vmatpush2.bf16.msra.mxu0 0
        %293 = vmatprep.subr.bf16.mxu0 0
        %294 = vmatpush2.bf16.msra.mxu0 0
        %295 = vmatprep.subr.bf16.mxu0 0
        %296 = vmatpush2.bf16.msra.mxu0 0
        %297 = vmatprep.subr.bf16.mxu0 0
        %298 = vmatpush2.bf16.msra.mxu0 0
        %299 = vmatprep.subr.bf16.mxu0 0
        %300 = vmatpush2.bf16.msra.mxu0 0
        %301 = vmatprep.mubr.bf16.mxu0 0
        %302 = vmatmul.mubr.bf16.gmra.mxu0 %v260
        %v303 = vpop.f32.mrf.mxu0
        %v304 = vadd.f32 0.0, %v303
        %v305 = vpop.f32.mrf.mxu0
        %v306 = vadd.f32 0.0, %v305
        %v307 = vpop.f32.mrf.mxu0
        %v308 = vpop.f32.mrf.mxu0
        %309 = vdwg.mxu0
        %v310 = vadd.f32 %v245, %v304
        %v311 = vadd.f32 %v246, %v306
        %312 = vst [vmem:[#allocation2] sm:$0xff] %v310
        %313 = vst [vmem:[#allocation2 + $0x8] sm:$0xff] %v311
        // Predicated region
        $region37: #{tpu_custom_call.1} parent=31 // pred_check
          %p314 = pneg %p239
        $region38: #{tpu_custom_call.1} parent=31 // pred_check_branch
          %316 = sbr.rel (%p314) target = $region40
        $region39: #{tpu_custom_call.1} parent=31 // pred_region
          %v317 = vld [vmem:[#allocation2] sm:$0xff]
          %v318 = vld [vmem:[#allocation2 + $0x8] sm:$0xff]
          %v319 = vld [vmem:[%s2] sm:$0xff]
          %321 = vset.pattern.permute.xlu0 0
          %322 = vperm.xlu0 %321, %v319
          %v323 = vpop.permute.xlu0 %322
          %v325 = vadd.f32 %v317, %v323
          %v326 = vadd.f32 %v318, %v323
          %327 = vst [vmem:[%s218] sm:$0xff] %v325
          %328 = vst [vmem:[%s218 + $0x8] sm:$0xff] %v326
        $region40: #{tpu_custom_call.1} parent=31 // pred_fallthru
          _
        %s329 = sand.u32 %s123, 1
        %s330 = scalar_lea.sflag [#allocation4], %s329
        %s331 = sand.u32 %s123, 1
        %s332 = smul.addr %s331, 16
        %s333 = scalar_lea.vmem [#allocation3], %s332
        // Predicated region
        $region41: #{tpu_custom_call.1} parent=31 // pred_check
          %p334 = pneg %p133
        $region42: #{tpu_custom_call.1} parent=31 // pred_check_branch
          %336 = sbr.rel (%p334) target = $region44
        $region43: #{tpu_custom_call.1} parent=31 // pred_region
          %s337 = smul.u32 2, %s23
          %s339 = ssub.s32 256, 256
          %340 = vsyncadd %s330, %s339
          %s341 = smul.addr %s22, 2
          %s342 = sadd.s32 %s337, %s341
          %s343 = smul.addr %s342, 128
          %s344 = scalar_lea.hbm %s3, %s343
          %s346 = sshll.u32 %s333, 4
          %s347 = int_to_ptr.vmem [resolvable:$true] %s346
          %349 = dma.vmem_to_hbm [thread:$0]  %s347, 256, %s344, %s330
        $region44: #{tpu_custom_call.1} parent=31 // pred_fallthru
          _
      $region32: #{tpu_custom_call.1} parent=5 // pred_fallthru
        _
      %p350 = scmp.le.s32.totalorder 2, %s12
      // Predicated region
      $region45: #{tpu_custom_call.1} parent=5 // pred_check
        %p351 = pneg %p350
      $region46: #{tpu_custom_call.1} parent=5 // pred_check_branch
        %353 = sbr.rel (%p351) target = $region48
      $region47: #{tpu_custom_call.1} parent=5 // pred_region
        %s354 = ssub.s32 %s12, 2
        // Predicated region
        $region49: #{tpu_custom_call.1} parent=47 // pred_check
          %p355 = pneg %p139
        $region50: #{tpu_custom_call.1} parent=47 // pred_check_branch
          %357 = sbr.rel (%p355) target = $region52
        $region51: #{tpu_custom_call.1} parent=47 // pred_region
          %s358 = sand.u32 %s124, 1
          %s359 = scalar_lea.sflag [#allocation4], %s358
          %s360 = sand.u32 %s124, 1
          %s361 = smul.addr %s360, 16
          %s362 = scalar_lea.vmem [#allocation3], %s361
          %363 = dma.done %s359, 256
        $region52: #{tpu_custom_call.1} parent=47 // pred_fallthru
          _
      $region48: #{tpu_custom_call.1} parent=5 // pred_fallthru
        _
    $region6: #{tpu_custom_call.1} parent=1 // loop_footer
      %s16 = sadd.s32 1, %s12
    $region7: #{tpu_custom_call.1} parent=1 // loop_footer_branch
      %11 = sbr.rel target = $region3
    $region8: #{tpu_custom_call.1} parent=1 // loop_exit
      _
    %364 = vsyncpa [#allocation4], 1
    %s365 = scalar_lea.sflag [#allocation4], 1
    %366 = vsyncpa %s365, 1

// kernel: tpu_custom_call.1
$region0: #{tpu_custom_call.1}
  #allocation0 [shape = 'u32[]', space=smem, size = 0x4, offset = 0x4, fixed_abs, tag = 'smem constant byte address 0x4 - core index']
  #allocation1 [shape = 'u32[144,128]{1,0:T(1,128)}', space=vmem, size = 0x12000, scoped, tag = 'internal scratch']
  #allocation2 [shape = 'f32[8,256]{1,0:T(8,128)}', space=vmem, size = 0x2000, scoped, tag = 'scratch operand']
  %s0 = inlined_call_operand.vmem [shape: bf16[2,4,256], index: 0, kind: input, shape index: {}]
  %s1 = inlined_call_operand.vmem [shape: bf16[8,4], index: 1, kind: input, shape index: {}]
  %s2 = inlined_call_operand.vmem [shape: f32[8,1], index: 2, kind: input, shape index: {}]
  %s3 = inlined_call_operand.hbm [shape: f32[2,8,256], index: 3, kind: output, shape index: {}]
  %s4 = sld [smem:[#allocation0]]
  $region53: #{tpu_custom_call.1} parent=0
    _
  %s6 = ssub.s32 1, %s4
  %s7 = scalar_select 0, %s6, %s4
  $region1: #{tpu_custom_call.1} parent=0
    #allocation3 [shape = 'u8[16384]{0}', space=vmem, size = 0x4000, scoped, tag = 'output window, operand 0']
    #allocation4 [shape = 's32[2]{0}', space=sflag, size = 0x8, scoped, tag = 'scoped memory for tpu_custom_call.1']
    %8 = vsyncpa [#allocation4], 0
    %s9 = scalar_lea.sflag [#allocation4], 1
    %10 = vsyncpa %s9, 0
    loop: start=0, step=1, limit=4
    $region2: #{tpu_custom_call.1} parent=1 // loop_pre_header
      _
    $region3: #{tpu_custom_call.1} parent=1 // loop_header
      %s12 = sphi 0, %s16
      %p13 = scmp.ge.s32.totalorder %s12, 4
      %s19 = sphi 0, %s38
      %s20 = sphi 0, %s34
      %s21 = sphi 0, %s30
      %s22 = sphi 0, %s19
      %s23 = sphi 0, %s20
      %s24 = sphi 0, %s21
      %s25 = sphi 0, %s22
      %s26 = sphi 0, %s23
      %s27 = sphi 0, %s24
      %s45 = sphi 0, %s47
      %s48 = sphi 0, %s45
      %s49 = sphi 0, %s48
      %s65 = sphi 0, %s49
      %s71 = sphi 0, %s73
      %s74 = sphi 0, %s71
      %s75 = sphi 0, %s74
      %s91 = sphi 0, %s75
      %s95 = sphi 0, %s95
      %s97 = sphi 0, %s95
      %s98 = sphi 0, %s97
      %s112 = sphi 0, %s98
      %s120 = sphi 0, %s122
      %s123 = sphi 0, %s120
      %s124 = sphi 0, %s123
      %s140 = sphi 0, %s124
    $region4: #{tpu_custom_call.1} parent=1 // loop_header_branch
      %15 = sbr.rel (%p13) target = $region8
    $region5: #{tpu_custom_call.1} parent=1 // loop_body
      %s17 = ssub.s32 %s12, 1
      %s18 = ssub.s32 %s12, 2
      %s28 = sadd.s32 1, %s21
      %p29 = scmp.ge.s32.totalorder %s28, 1
      %s30 = scalar_select %p29, 0, %s28
      %s31 = sadd.s32 1, %s20
      %s32 = scalar_select %p29, %s31, %s20
      %p33 = scmp.ge.s32.totalorder %s32, 1
      %s34 = scalar_select %p33, 0, %s32
      %s35 = sadd.s32 1, %s19
      %s36 = scalar_select %p33, %s35, %s19
      %p37 = scmp.ge.s32.totalorder %s36, 2
      %s38 = scalar_select %p37, 0, %s36
      %s39 = ssub.s32 %s19, %s38
      %s40 = ssub.s32 %s21, %s30
      %s41 = sor.u32 %s39, %s40
      %s42 = ssub.s32 %s20, %s34
      %s43 = sor.u32 %s41, %s42
      %p44 = scmp.eq.s32.totalorder %s43, 0
      %s46 = sadd.s32 %s45, 1
      %s47 = scalar_select %p44, %s45, %s46
      %p50 = pneg %p44
      %p51 = scmp.eq.s32.totalorder %s12, 1
      %p52 = por %p50, %p51
      %p53 = scmp.ne.s32.totalorder %s45, %s48
      %p54 = scmp.eq.s32.totalorder %s12, 0
      %p55 = por %p53, %p54
      %p56 = scmp.ne.s32.totalorder %s45, %s48
      %p57 = scmp.eq.s32.totalorder %s17, 1
      %p58 = por %p56, %p57
      %p59 = scmp.ne.s32.totalorder %s48, %s49
      %p60 = scmp.eq.s32.totalorder %s17, 0
      %p61 = por %p59, %p60
      %p62 = scmp.ne.s32.totalorder %s48, %s49
      %p63 = scmp.eq.s32.totalorder %s18, 1
      %p64 = por %p62, %p63
      %p66 = scmp.ne.s32.totalorder %s49, %s65
      %p67 = scmp.eq.s32.totalorder %s18, 0
      %p68 = por %p66, %p67
      %s69 = ssub.s32 %s21, %s30
      %p70 = scmp.eq.s32.totalorder %s69, 0
      %s72 = sadd.s32 %s71, 1
      %s73 = scalar_select %p70, %s71, %s72
      %p76 = pneg %p70
      %p77 = scmp.eq.s32.totalorder %s12, 1
      %p78 = por %p76, %p77
      %p79 = scmp.ne.s32.totalorder %s71, %s74
      %p80 = scmp.eq.s32.totalorder %s12, 0
      %p81 = por %p79, %p80
      %p82 = scmp.ne.s32.totalorder %s71, %s74
      %p83 = scmp.eq.s32.totalorder %s17, 1
      %p84 = por %p82, %p83
      %p85 = scmp.ne.s32.totalorder %s74, %s75
      %p86 = scmp.eq.s32.totalorder %s17, 0
      %p87 = por %p85, %p86
      %p88 = scmp.ne.s32.totalorder %s74, %s75
      %p89 = scmp.eq.s32.totalorder %s18, 1
      %p90 = por %p88, %p89
      %p92 = scmp.ne.s32.totalorder %s75, %s91
      %p93 = scmp.eq.s32.totalorder %s18, 0
      %p94 = por %p92, %p93
      %s96 = sadd.s32 %s95, 1
      %p99 = scmp.eq.s32.totalorder %s12, 1
      %p100 = scmp.ne.s32.totalorder %s95, %s97
      %p101 = scmp.eq.s32.totalorder %s12, 0
      %p102 = por %p100, %p101
      %p103 = scmp.ne.s32.totalorder %s95, %s97
      %p104 = scmp.eq.s32.totalorder %s17, 1
      %p105 = por %p103, %p104
      %p106 = scmp.ne.s32.totalorder %s97, %s98
      %p107 = scmp.eq.s32.totalorder %s17, 0
      %p108 = por %p106, %p107
      %p109 = scmp.ne.s32.totalorder %s97, %s98
      %p110 = scmp.eq.s32.totalorder %s18, 1
      %p111 = por %p109, %p110
      %p113 = scmp.ne.s32.totalorder %s98, %s112
      %p114 = scmp.eq.s32.totalorder %s18, 0
      %p115 = por %p113, %p114
      %s116 = ssub.s32 %s19, %s38
      %s117 = ssub.s32 %s20, %s34
      %s118 = sor.u32 %s116, %s117
      %p119 = scmp.eq.s32.totalorder %s118, 0
      %s121 = sadd.s32 %s120, 1
      %s122 = scalar_select %p119, %s120, %s121
      %p125 = pneg %p119
      %p126 = scmp.eq.s32.totalorder %s12, 1
      %p127 = por %p125, %p126
      %p128 = scmp.ne.s32.totalorder %s120, %s123
      %p129 = scmp.eq.s32.totalorder %s12, 0
      %p130 = por %p128, %p129
      %p131 = scmp.ne.s32.totalorder %s120, %s123
      %p132 = scmp.eq.s32.totalorder %s17, 1
      %p133 = por %p131, %p132
      %p134 = scmp.ne.s32.totalorder %s123, %s124
      %p135 = scmp.eq.s32.totalorder %s17, 0
      %p136 = por %p134, %p135
      %p137 = scmp.ne.s32.totalorder %s123, %s124
      %p138 = scmp.eq.s32.totalorder %s18, 1
      %p139 = por %p137, %p138
      %p141 = scmp.ne.s32.totalorder %s124, %s140
      %p142 = scmp.eq.s32.totalorder %s18, 0
      %p143 = por %p141, %p142
      %p144 = scmp.le.s32.totalorder 1, %s12
      %p145 = scmp.lt.s32.totalorder %s12, 3
      %p146 = pnand %p144, %p145
      %p147 = pneg %p146
      // Predicated region
      $region9: #{tpu_custom_call.1} parent=5 // pred_check
        _
      $region10: #{tpu_custom_call.1} parent=5 // pred_check_branch
        %149 = sbr.rel (%p146) target = $region12
      $region11: #{tpu_custom_call.1} parent=5 // pred_region
        %s150 = ssub.s32 %s12, 1
        // Predicated region
        $region13: #{tpu_custom_call.1} parent=11 // pred_check
          %p151 = pneg %p87
        $region14: #{tpu_custom_call.1} parent=11 // pred_check_branch
          %153 = sbr.rel (%p151) target = $region16
        $region15: #{tpu_custom_call.1} parent=11 // pred_region
          %p154 = scmp.lt.s32.totalorder %s24, 0
          %s155 = scalar_select %p154, %s24, 0
          %s156 = smul.addr %s155, 4
          %s157 = scalar_lea.vmem %s1, %s156
        $region16: #{tpu_custom_call.1} parent=11 // pred_fallthru
          _
        // Predicated region
        $region17: #{tpu_custom_call.1} parent=11 // pred_check
          %p158 = pneg %p108
        $region18: #{tpu_custom_call.1} parent=11 // pred_check_branch
          %160 = sbr.rel (%p158) target = $region20
        $region19: #{tpu_custom_call.1} parent=11 // pred_region
          _
        $region20: #{tpu_custom_call.1} parent=11 // pred_fallthru
          _
      $region12: #{tpu_custom_call.1} parent=5 // pred_fallthru
        _
      %p161 = scmp.lt.s32.totalorder %s12, 2
      // Predicated region
      $region21: #{tpu_custom_call.1} parent=5 // pred_check
        %p162 = pneg %p161
      $region22: #{tpu_custom_call.1} parent=5 // pred_check_branch
        %164 = sbr.rel (%p162) target = $region24
      $region23: #{tpu_custom_call.1} parent=5 // pred_region
        // Predicated region
        $region25: #{tpu_custom_call.1} parent=23 // pred_check
          %p165 = pneg %p55
        $region26: #{tpu_custom_call.1} parent=23 // pred_check_branch
          %167 = sbr.rel (%p165) target = $region28
        $region27: #{tpu_custom_call.1} parent=23 // pred_region
          %s168 = smul.u32 2, %s20
          %p169 = scmp.lt.s32.totalorder %s19, 1
          %s170 = scalar_select %p169, %s19, 1
          %p171 = scmp.lt.s32.totalorder %s21, 0
          %s172 = scalar_select %p171, %s21, 0
          %p173 = scmp.lt.s32.totalorder %s168, 1
          %s174 = scalar_select %p173, %s168, 1
          %s175 = smul.addr %s172, 2
          %s176 = sadd.s32 %s174, %s175
          %s177 = smul.addr %s170, 2
          %s178 = sadd.s32 %s176, %s177
          %s179 = smul.addr %s178, 2
          %s180 = scalar_lea.vmem %s0, %s179
          %s181 = smul.u32 2, %s20
        $region28: #{tpu_custom_call.1} parent=23 // pred_fallthru
          _
      $region24: #{tpu_custom_call.1} parent=5 // pred_fallthru
        _
      %p182 = scmp.le.s32.totalorder 1, %s12
      %p183 = scmp.lt.s32.totalorder %s12, 3
      %p184 = pnand %p182, %p183
      %p185 = pneg %p184
      // Predicated region
      $region29: #{tpu_custom_call.1} parent=5 // pred_check
        _
      $region30: #{tpu_custom_call.1} parent=5 // pred_check_branch
        %187 = sbr.rel (%p184) target = $region32
      $region31: #{tpu_custom_call.1} parent=5 // pred_region
        %s188 = ssub.s32 %s12, 1
        %s189 = smul.u32 2, %s23
        %p190 = scmp.lt.s32.totalorder %s22, 1
        %s191 = scalar_select %p190, %s22, 1
        %p192 = scmp.lt.s32.totalorder %s24, 0
        %s193 = scalar_select %p192, %s24, 0
        %p194 = scmp.lt.s32.totalorder %s189, 1
        %s195 = scalar_select %p194, %s189, 1
        %s196 = smul.addr %s193, 2
        %s197 = sadd.s32 %s195, %s196
        %s198 = smul.addr %s191, 2
        %s199 = sadd.s32 %s197, %s198
        %s200 = smul.addr %s199, 2
        %s201 = scalar_lea.vmem %s0, %s200
        %p202 = pneg %p61
        %p203 = pneg %p58
        %p204 = scmp.lt.s32.totalorder %s24, 0
        %s205 = scalar_select %p204, %s24, 0
        %s206 = smul.addr %s205, 4
        %s207 = scalar_lea.vmem %s1, %s206
        %p208 = pneg %p87
        %p209 = pneg %p84
        %p210 = pneg %p108
        %p211 = pneg %p105
        %p212 = pneg %p136
        %p213 = pneg %p133
        %s214 = sand.u32 %s123, 1
        %s215 = scalar_lea.sflag [#allocation4], %s214
        %s216 = sand.u32 %s123, 1
        %s217 = smul.addr %s216, 16
        %s218 = scalar_lea.vmem [#allocation3], %s217
        %s219 = smul.u32 2, %s23
        %p220 = scmp.lt.s32.totalorder %s22, 1
        %s221 = scalar_select %p220, %s22, 1
        %p222 = scmp.lt.s32.totalorder %s24, 0
        %s223 = scalar_select %p222, %s24, 0
        %p224 = scmp.lt.s32.totalorder %s219, 1
        %s225 = scalar_select %p224, %s219, 1
        %s226 = smul.addr %s223, 2
        %s227 = sadd.s32 %s225, %s226
        %s228 = smul.addr %s221, 2
        %s229 = sadd.s32 %s227, %s228
        %s230 = smul.addr %s229, 2
        %s231 = scalar_lea.vmem %s0, %s230
        %s232 = smul.u32 2, %s23
        %p233 = scmp.lt.s32.totalorder %s24, 0
        %s234 = scalar_select %p233, %s24, 0
        %s235 = smul.addr %s234, 4
        %s236 = scalar_lea.vmem %s1, %s235
        %s237 = smul.u32 2, %s23
        %p239 = scmp.eq.s32.totalorder %s24, 0
        // Predicated region
        $region33: #{tpu_custom_call.1} parent=31 // pred_check
          %p240 = pneg %p239
        $region34: #{tpu_custom_call.1} parent=31 // pred_check_branch
          %242 = sbr.rel (%p240) target = $region36
        $region35: #{tpu_custom_call.1} parent=31 // pred_region
          %243 = vst [vmem:[#allocation2] sm:$0xff] 0.0
          %244 = vst [vmem:[#allocation2 + $0x8] sm:$0xff] 0.0
        $region36: #{tpu_custom_call.1} parent=31 // pred_fallthru
          _
        %v245 = vld [vmem:[#allocation2] sm:$0xff]
        %v246 = vld [vmem:[#allocation2 + $0x8] sm:$0xff]
        %v247 = vld [vmem:[%s236] sm:$0xf]
        %v248 = vld [vmem:[%s231] sm:$0xf]
        %v251 = vunpack.c.l.s4 1983009808
        %v252 = vunpack.c.0.s8 %v251
        %v253 = vlaneseq
        %v254 = vshrl.u32 %v253, 7
        %v255 = vsub.s32 %v252, %v254
        %v256 = vrot.slane %v248, %v255
        %v257 = vcombine.high %v256, %v256
        %vm258 = vcmask 31744
        %v260 = vsel %vm258, %v247, 0
        %vm262 = vcmask 1041408
        %v264 = vsel %vm262, %v256, 0
        %v267 = vsel %vm262, %v257, 0
        %269 = vmatprep.subr.bf16.mxu0 0
        %270 = vmatpush1.bf16.msra.mxu0 0
        %271 = vmatprep.subr.bf16.mxu0 0
        %272 = vmatpush1.bf16.msra.mxu0 0
        %273 = vmatprep.subr.bf16.mxu0 0
        %274 = vmatpush1.bf16.msra.mxu0 0
        %275 = vmatprep.subr.bf16.mxu0 0
        %276 = vmatpush1.bf16.msra.mxu0 0
        %277 = vmatprep.subr.bf16.mxu0 0
        %278 = vmatpush1.bf16.msra.mxu0 0
        %279 = vmatprep.subr.bf16.mxu0 0
        %280 = vmatpush1.bf16.msra.mxu0 0
        %281 = vmatprep.subr.bf16.mxu0 0
        %282 = vmatpush1.bf16.msra.mxu0 0
        %283 = vmatprep.subr.bf16.mxu0 %v267
        %284 = vmatpush1.bf16.msra.mxu0 %v264
        %285 = vmatprep.subr.bf16.mxu0 0
        %286 = vmatpush2.bf16.msra.mxu0 0
        %287 = vmatprep.subr.bf16.mxu0 0
        %288 = vmatpush2.bf16.msra.mxu0 0
        %289 = vmatprep.subr.bf16.mxu0 0
        %290 = vmatpush2.bf16.msra.mxu0 0
        %291 = vmatprep.subr.bf16.mxu0 0
        %292 = vmatpush2.bf16.msra.mxu0 0
        %293 = vmatprep.subr.bf16.mxu0 0
        %294 = vmatpush2.bf16.msra.mxu0 0
        %295 = vmatprep.subr.bf16.mxu0 0
        %296 = vmatpush2.bf16.msra.mxu0 0
        %297 = vmatprep.subr.bf16.mxu0 0
        %298 = vmatpush2.bf16.msra.mxu0 0
        %299 = vmatprep.subr.bf16.mxu0 0
        %300 = vmatpush2.bf16.msra.mxu0 0
        %301 = vmatprep.mubr.bf16.mxu0 0
        %302 = vmatmul.mubr.bf16.gmra.mxu0 %v260
        %v303 = vpop.f32.mrf.mxu0
        %v304 = vadd.f32 0.0, %v303
        %v305 = vpop.f32.mrf.mxu0
        %v306 = vadd.f32 0.0, %v305
        %v307 = vpop.f32.mrf.mxu0
        %v308 = vpop.f32.mrf.mxu0
        %309 = vdwg.mxu0
        %v310 = vadd.f32 %v245, %v304
        %v311 = vadd.f32 %v246, %v306
        %312 = vst [vmem:[#allocation2] sm:$0xff] %v310
        %313 = vst [vmem:[#allocation2 + $0x8] sm:$0xff] %v311
        // Predicated region
        $region37: #{tpu_custom_call.1} parent=31 // pred_check
          %p314 = pneg %p239
        $region38: #{tpu_custom_call.1} parent=31 // pred_check_branch
          %316 = sbr.rel (%p314) target = $region40
        $region39: #{tpu_custom_call.1} parent=31 // pred_region
          %v317 = vld [vmem:[#allocation2] sm:$0xff]
          %v318 = vld [vmem:[#allocation2 + $0x8] sm:$0xff]
          %v319 = vld [vmem:[%s2] sm:$0xff]
          %321 = vset.pattern.permute.xlu0 0
          %322 = vperm.xlu0 %321, %v319
          %v323 = vpop.permute.xlu0 %322
          %v325 = vadd.f32 %v317, %v323
          %v326 = vadd.f32 %v318, %v323
          %327 = vst [vmem:[%s218] sm:$0xff] %v325
          %328 = vst [vmem:[%s218 + $0x8] sm:$0xff] %v326
        $region40: #{tpu_custom_call.1} parent=31 // pred_fallthru
          _
        %s329 = sand.u32 %s123, 1
        %s330 = scalar_lea.sflag [#allocation4], %s329
        %s331 = sand.u32 %s123, 1
        %s332 = smul.addr %s331, 16
        %s333 = scalar_lea.vmem [#allocation3], %s332
        // Predicated region
        $region41: #{tpu_custom_call.1} parent=31 // pred_check
          %p334 = pneg %p133
        $region42: #{tpu_custom_call.1} parent=31 // pred_check_branch
          %336 = sbr.rel (%p334) target = $region44
        $region43: #{tpu_custom_call.1} parent=31 // pred_region
          %s337 = smul.u32 2, %s23
          %s339 = ssub.s32 256, 256
          %340 = vsyncadd %s330, %s339
          %s341 = smul.addr %s22, 2
          %s342 = sadd.s32 %s337, %s341
          %s343 = smul.addr %s342, 128
          %s344 = scalar_lea.hbm %s3, %s343
          %s346 = sshll.u32 %s333, 4
          %s347 = int_to_ptr.vmem [resolvable:$true] %s346
          %349 = dma.vmem_to_hbm [thread:$0]  %s347, 256, %s344, %s330
        $region44: #{tpu_custom_call.1} parent=31 // pred_fallthru
          _
      $region32: #{tpu_custom_call.1} parent=5 // pred_fallthru
        _
      %p350 = scmp.le.s32.totalorder 2, %s12
      // Predicated region
      $region45: #{tpu_custom_call.1} parent=5 // pred_check
        %p351 = pneg %p350
      $region46: #{tpu_custom_call.1} parent=5 // pred_check_branch
        %353 = sbr.rel (%p351) target = $region48
      $region47: #{tpu_custom_call.1} parent=5 // pred_region
        %s354 = ssub.s32 %s12, 2
        // Predicated region
        $region49: #{tpu_custom_call.1} parent=47 // pred_check
          %p355 = pneg %p139
        $region50: #{tpu_custom_call.1} parent=47 // pred_check_branch
          %357 = sbr.rel (%p355) target = $region52
        $region51: #{tpu_custom_call.1} parent=47 // pred_region
          %s358 = sand.u32 %s124, 1
          %s359 = scalar_lea.sflag [#allocation4], %s358
          %s360 = sand.u32 %s124, 1
          %s361 = smul.addr %s360, 16
          %s362 = scalar_lea.vmem [#allocation3], %s361
          %363 = dma.done %s359, 256
        $region52: #{tpu_custom_call.1} parent=47 // pred_fallthru
          _
      $region48: #{tpu_custom_call.1} parent=5 // pred_fallthru
        _
    $region6: #{tpu_custom_call.1} parent=1 // loop_footer
      %s16 = sadd.s32 1, %s12
    $region7: #{tpu_custom_call.1} parent=1 // loop_footer_branch
      %11 = sbr.rel target = $region3
    $region8: #{tpu_custom_call.1} parent=1 // loop_exit
      _
    %364 = vsyncpa [#allocation4], 1
    %s365 = scalar_lea.sflag [#allocation4], 1
    %366 = vsyncpa %s365, 1

</llo_original>
